<compile_context>
chip_gen: v5e
topology: v5e:2x2
jax: 0.10.0
libtpu: 0.0.40
codegen_flags: <defaults>
</compile_context>

<pallas_src>
import math
import functools

import numpy as np
import jax
import jax.numpy as jnp
from jax.experimental import pallas as pl
from jax.experimental.pallas import tpu as pltpu

RMS_EPS = 1e-6


# ----------------------------- tiling helper -----------------------------

def _pick_tile(dim, cap, align):
    """Largest tile <= cap (multiple of `align`) that divides dim; the whole
    dim when it already fits (satisfies the (8,128)-or-full-dim rule)."""
    if dim <= cap:
        return dim
    t = (cap // align) * align
    while t >= align:
        if dim % t == 0:
            return t
        t -= align
    return dim


# ----------------------------- Pallas kernels -----------------------------

def _matmul_kernel(x_ref, w_ref, o_ref, acc_ref):
    """Tiled matmul with f32 accumulation; x cast to bf16, w already bf16."""
    @pl.when(pl.program_id(2) == 0)
    def _():
        acc_ref[...] = jnp.zeros_like(acc_ref)

    acc_ref[...] += jnp.dot(x_ref[...].astype(jnp.bfloat16), w_ref[...],
                            preferred_element_type=jnp.float32)

    @pl.when(pl.program_id(2) == pl.num_programs(2) - 1)
    def _():
        o_ref[...] = acc_ref[...].astype(o_ref.dtype)


def matmul(x, w, *, tm_cap=256, tn_cap=256, tk_cap=512):
    """x: (M, K) f32/bf16, w: (K, N) bf16 -> (M, N) f32."""
    M, K = x.shape
    _, N = w.shape
    tm = _pick_tile(M, tm_cap, 8)
    tn = _pick_tile(N, tn_cap, 128)
    tk = _pick_tile(K, tk_cap, 128)
    return pl.pallas_call(
        _matmul_kernel,
        out_shape=jax.ShapeDtypeStruct((M, N), jnp.float32),
        grid=(M // tm, N // tn, K // tk),
        in_specs=[pl.BlockSpec((tm, tk), lambda i, j, k: (i, k)),
                  pl.BlockSpec((tk, tn), lambda i, j, k: (k, j))],
        out_specs=pl.BlockSpec((tm, tn), lambda i, j, k: (i, j)),
        scratch_shapes=[pltpu.VMEM((tm, tn), jnp.float32)],
        compiler_params=pltpu.CompilerParams(
            dimension_semantics=("parallel", "parallel", "arbitrary")),
    )(x, w)


def _norm_matmul_kernel(x_ref, g_ref, w_ref, o_ref):
    """RMSNorm fused into the projection prologue (K held whole per tile)."""
    x = x_ref[...].astype(jnp.float32)
    var = jnp.mean(x * x, axis=-1, keepdims=True)
    xn = (x * jax.lax.rsqrt(var + RMS_EPS)
          * g_ref[...].astype(jnp.float32)).astype(jnp.bfloat16)
    o_ref[...] = jnp.dot(xn, w_ref[...],
                         preferred_element_type=jnp.float32).astype(o_ref.dtype)


def norm_matmul(x, gamma, w, *, tm_cap=256, tn_cap=256):
    """RMSNorm(x) @ w.  x: (M, K) f32, gamma: (1, K) f32, w: (K, N) bf16."""
    M, K = x.shape
    _, N = w.shape
    tm = _pick_tile(M, tm_cap, 8)
    tn = _pick_tile(N, tn_cap, 128)
    return pl.pallas_call(
        _norm_matmul_kernel,
        out_shape=jax.ShapeDtypeStruct((M, N), jnp.float32),
        grid=(M // tm, N // tn),
        in_specs=[pl.BlockSpec((tm, K), lambda i, j: (i, 0)),
                  pl.BlockSpec((1, K), lambda i, j: (0, 0)),
                  pl.BlockSpec((K, tn), lambda i, j: (0, j))],
        out_specs=pl.BlockSpec((tm, tn), lambda i, j: (i, j)),
        compiler_params=pltpu.CompilerParams(
            dimension_semantics=("parallel", "parallel")),
    )(x, gamma, w)


def _norm_gated_mlp_kernel(x_ref, g_ref, wfc_ref, wg_ref, wp_ref, o_ref, acc_ref):
    """RMSNorm + SiLU-gated MLP, tiled over the intermediate dim F with an
    f32 down-projection accumulator."""
    f = pl.program_id(1)

    @pl.when(f == 0)
    def _():
        acc_ref[...] = jnp.zeros_like(acc_ref)

    x = x_ref[...].astype(jnp.float32)
    var = jnp.mean(x * x, axis=-1, keepdims=True)
    xn = (x * jax.lax.rsqrt(var + RMS_EPS)
          * g_ref[...].astype(jnp.float32)).astype(jnp.bfloat16)

    fc = jnp.dot(xn, wfc_ref[...], preferred_element_type=jnp.float32)
    fc = fc * jax.nn.sigmoid(fc)                       # SiLU branch
    gate = jnp.dot(xn, wg_ref[...], preferred_element_type=jnp.float32)
    inter = (fc * gate).astype(jnp.bfloat16)
    acc_ref[...] += jnp.dot(inter, wp_ref[...],
                            preferred_element_type=jnp.float32)

    @pl.when(f == pl.num_programs(1) - 1)
    def _():
        o_ref[...] = acc_ref[...].astype(o_ref.dtype)


def norm_gated_mlp(x, gamma, w_fc, w_gate, w_proj, *, tm_cap=128, tf_cap=256):
    """x: (M, H) f32; weights bf16; output (M, H) f32.
    Tile budget (bf16 weights, f32 x/acc) stays well under the 32 MiB scoped
    VMEM default, so it also fits v7x's 64 MiB physical VMEM."""
    M, H = x.shape
    _, F = w_fc.shape
    tm = _pick_tile(M, tm_cap, 8)
    tf = _pick_tile(F, tf_cap, 128)
    return pl.pallas_call(
        _norm_gated_mlp_kernel,
        out_shape=jax.ShapeDtypeStruct((M, H), jnp.float32),
        grid=(M // tm, F // tf),
        in_specs=[pl.BlockSpec((tm, H), lambda i, f: (i, 0)),
                  pl.BlockSpec((1, H), lambda i, f: (0, 0)),
                  pl.BlockSpec((H, tf), lambda i, f: (0, f)),
                  pl.BlockSpec((H, tf), lambda i, f: (0, f)),
                  pl.BlockSpec((tf, H), lambda i, f: (f, 0))],
        out_specs=pl.BlockSpec((tm, H), lambda i, f: (i, 0)),
        scratch_shapes=[pltpu.VMEM((tm, H), jnp.float32)],
        compiler_params=pltpu.CompilerParams(
            dimension_semantics=("parallel", "arbitrary")),
    )(x, gamma, w_fc, w_gate, w_proj)


def _rmsnorm_kernel(x_ref, g_ref, o_ref):
    x = x_ref[...].astype(jnp.float32)
    var = jnp.mean(x * x, axis=-1, keepdims=True)
    o_ref[...] = (x * jax.lax.rsqrt(var + RMS_EPS)
                  * g_ref[...].astype(jnp.float32)).astype(o_ref.dtype)


def rmsnorm(x2d, gamma, *, tm_cap=256):
    """Standalone RMSNorm (only used for the final ln_f). x2d: (M, H)."""
    M, H = x2d.shape
    tm = _pick_tile(M, tm_cap, 8)
    return pl.pallas_call(
        _rmsnorm_kernel,
        out_shape=jax.ShapeDtypeStruct((M, H), jnp.float32),
        grid=(M // tm,),
        in_specs=[pl.BlockSpec((tm, H), lambda i: (i, 0)),
                  pl.BlockSpec((1, H), lambda i: (0, 0))],
        out_specs=pl.BlockSpec((tm, H), lambda i: (i, 0)),
        compiler_params=pltpu.CompilerParams(
            dimension_semantics=("parallel",)),
    )(x2d, gamma)


def _attn_kernel(q_ref, k_ref, v_ref, m_ref, o_ref, *, scale):
    # q: (S, D); k, v: (KV, D); mask: (S, KV).  1/sqrt(D) folded into q.
    q = (q_ref[...].astype(jnp.float32) * scale).astype(jnp.bfloat16)
    k = k_ref[...].astype(jnp.bfloat16)
    v = v_ref[...].astype(jnp.bfloat16)
    s = jax.lax.dot_general(q, k, (((1,), (1,)), ((), ())),
                            preferred_element_type=jnp.float32)   # (S, KV)
    s = s + m_ref[...].astype(jnp.float32)
    s_max = jnp.max(s, axis=-1, keepdims=True)
    p = jnp.exp(s - s_max)
    p = p * pl.reciprocal(jnp.sum(p, axis=-1, keepdims=True), approx=True)
    o_ref[...] = jax.lax.dot_general(
        p.astype(jnp.bfloat16), v, (((1,), (0,)), ((), ())),
        preferred_element_type=jnp.float32).astype(o_ref.dtype)


def attention(q, k, v, mask, head_dim):
    """q: (B, NH, S, D); k, v: (B, NKV, KV, D); mask: (B, S, KV) head-invariant.
    Grid is (B, NKV, group) with the group axis innermost so the K/V block
    index is constant across consecutive steps (Pallas skips the re-DMA):
    GQA K/V reuse without repeat_kv materialization."""
    B, NH, S, D = q.shape
    _, NKV, KV, _ = k.shape
    group = NH // NKV
    scale = 1.0 / math.sqrt(head_dim)
    kern = functools.partial(_attn_kernel, scale=scale)
    return pl.pallas_call(
        kern,
        out_shape=jax.ShapeDtypeStruct((B, NH, S, D), jnp.float32),
        grid=(B, NKV, group),
        in_specs=[
            pl.BlockSpec((None, None, S, D),
                         lambda b, h, g: (b, h * group + g, 0, 0)),
            pl.BlockSpec((None, None, KV, D), lambda b, h, g: (b, h, 0, 0)),
            pl.BlockSpec((None, None, KV, D), lambda b, h, g: (b, h, 0, 0)),
            pl.BlockSpec((None, S, KV), lambda b, h, g: (b, 0, 0)),
        ],
        out_specs=pl.BlockSpec((None, None, S, D),
                               lambda b, h, g: (b, h * group + g, 0, 0)),
        compiler_params=pltpu.CompilerParams(
            dimension_semantics=("parallel", "parallel", "arbitrary")),
    )(q, k, v, mask)
    # TODO(synk): for long contexts, add KV-axis flash-style tiling with an
    #             online-softmax VMEM accumulator (binding on v7x's 64 MiB).


# ----------------------------- JAX glue -----------------------------

def rotary_cos_sin_cache(head_dim, max_position_embeddings, base=10000,
                         dtype=np.float32):
    inv_freq = 1.0 / base ** (np.arange(0, head_dim, 2, dtype=dtype) / head_dim)
    t = np.arange(max_position_embeddings, dtype=dtype)
    freqs = np.einsum('i,j->ij', t, inv_freq)
    emb = np.concatenate((freqs, freqs), axis=-1)
    cos_cached = np.cos(emb)[None, None].astype(dtype)   # (1, 1, max_pos, D)
    sin_cached = np.sin(emb)[None, None].astype(dtype)
    return jnp.asarray(cos_cached), jnp.asarray(sin_cached)


def apply_rotary_pos_emb(x, cos, sin):
    """x: (B, H, S, D); cos/sin: (1, 1, S, D). Matches rotate_half reference."""
    d = x.shape[-1]
    x1 = x[..., : d // 2]
    x2 = x[..., d // 2:]
    rot = jnp.concatenate((-1.0 * x2, x1), axis=-1)
    return x * cos + rot * sin


def decoder_layer(h, lp, past_kv, attention_mask, cfg, cos_cached, sin_cached):
    B, S, H = h.shape
    NH, NKV, D = cfg["num_heads"], cfg["num_kv_heads"], cfg["head_dim"]

    # --- self attention block ---
    residual = h
    # input RMSNorm fused into the single fused-QKV projection kernel
    qkv = norm_matmul(h.reshape(B * S, H), lp["input_ln"], lp["wqkv"])
    q = qkv[:, : NH * D].reshape(B, S, NH, D).transpose(0, 2, 1, 3)
    k = qkv[:, NH * D: NH * D + NKV * D].reshape(B, S, NKV, D).transpose(0, 2, 1, 3)
    v = qkv[:, NH * D + NKV * D:].reshape(B, S, NKV, D).transpose(0, 2, 1, 3)

    past_k = past_kv[:, 0]                     # (B, NKV, past_len, D)
    past_v = past_kv[:, 1]
    past_len = past_kv.shape[3]
    kv_len = past_len + S

    cos = cos_cached[:, :, past_len:kv_len, :]
    sin = sin_cached[:, :, past_len:kv_len, :]
    q = apply_rotary_pos_emb(q, cos, sin)
    k = apply_rotary_pos_emb(k, cos, sin)

    key_states = jnp.concatenate([past_k, k], axis=2)      # (B, NKV, kv_len, D)
    value_states = jnp.concatenate([past_v, v], axis=2)
    present = jnp.stack([key_states, value_states], axis=1)  # (B, 2, NKV, kv_len, D)

    # Reference adds the same (causal/padding) mask to every head; stream a
    # head-invariant (B, Q, KV) slice instead of a dense (B, NH, Q, KV) tensor.
    causal_mask = attention_mask[:, 0, kv_len - S: kv_len, :kv_len]

    ctx = attention(q, key_states, value_states, causal_mask, D)  # (B, NH, S, D)
    ctx = ctx.transpose(0, 2, 1, 3).reshape(B * S, NH * D)
    attn_out = matmul(ctx, lp["wo"]).reshape(B, S, H)
    h = residual + attn_out

    # --- MLP block (post-attention RMSNorm fused into the MLP kernel) ---
    residual = h
    mlp_out = norm_gated_mlp(h.reshape(B * S, H), lp["post_ln"],
                             lp["w_fc"], lp["w_gate"], lp["w_proj"]).reshape(B, S, H)
    h = residual + mlp_out
    return h, present


def deci_model_forward(params, input_ids, past_key_values, attention_mask, cfg):
    # vocab embedding (gather is glue)
    h = jnp.take(params["embedding"], input_ids, axis=0)   # (B, S, H)
    presents = []
    for lp, past in zip(params["layers"], past_key_values):
        h, present = decoder_layer(h, lp, past, attention_mask, cfg,
                                   params["cos_cached"], params["sin_cached"])
        presents.append(present)
    h = rmsnorm(h.reshape(-1, h.shape[-1]), params["ln_f"]).reshape(h.shape)
    return h, tuple(presents)


# ----------------------------- parameter init -----------------------------

def init_params(key, cfg):
    H = cfg["hidden_size"]
    NH, NKV, D = cfg["num_heads"], cfg["num_kv_heads"], cfg["head_dim"]
    F = cfg["intermediate_size"]
    V = cfg["vocab_size"]

    def nrm(k, shape, scale=0.02, dtype=jnp.bfloat16):
        return (scale * jax.random.normal(k, shape, dtype=jnp.float32)).astype(dtype)

    keys = jax.random.split(key, 2 + cfg["num_layers"])
    params = {
        "embedding": nrm(keys[0], (V, H), dtype=jnp.float32),
        "ln_f": jnp.ones((1, H), jnp.float32),
        "layers": [],
    }
    cos_cached, sin_cached = rotary_cos_sin_cache(D, cfg["max_position_embeddings"])
    params["cos_cached"] = cos_cached
    params["sin_cached"] = sin_cached

    for li in range(cfg["num_layers"]):
        lk = jax.random.split(keys[2 + li], 7)
        # q | k | v projection weights fused along the output (N) dimension
        wq = nrm(lk[0], (H, NH * D))
        wk = nrm(lk[1], (H, NKV * D))
        wv = nrm(lk[2], (H, NKV * D))
        params["layers"].append({
            "input_ln": jnp.ones((1, H), jnp.float32),
            "post_ln": jnp.ones((1, H), jnp.float32),
            "wqkv": jnp.concatenate([wq, wk, wv], axis=1),     # bf16
            "wo": nrm(lk[3], (NH * D, H)),                     # bf16
            "w_fc": nrm(lk[4], (H, F)),                        # SiLU branch, bf16
            "w_gate": nrm(lk[5], (H, F)),                      # linear gate, bf16
            "w_proj": nrm(lk[6], (F, H)),                      # bf16
        })
    return params


# ----------------------------- main -----------------------------

if __name__ == "__main__":
    cfg = dict(
        num_layers=2,
        num_heads=4,
        num_kv_heads=2,
        hidden_size=32,
        head_dim=32 // 4,
        vocab_size=64,
        max_position_embeddings=32,
        intermediate_size=64,
    )
    B, S, PAST = 2, 8, 4
    NH, NKV, D = cfg["num_heads"], cfg["num_kv_heads"], cfg["head_dim"]

    root = jax.random.PRNGKey(0)
    k_params, k_ids, k_kv = jax.random.split(root, 3)

    params = init_params(k_params, cfg)

    input_ids = jax.random.randint(k_ids, (B, S), 0, cfg["vocab_size"],
                                   dtype=jnp.int32)

    # per-layer KV cache: (B, 2, n_kv_heads, past_len, head_dim)
    kv_keys = jax.random.split(k_kv, cfg["num_layers"])
    past_key_values = [
        0.1 * jax.random.normal(kk, (B, 2, NKV, PAST, D), dtype=jnp.float32)
        for kk in kv_keys
    ]

    # additive causal attention mask over absolute positions:
    # (B, num_heads, max_pos, max_pos); 0 where allowed, -1e9 where masked.
    MP = cfg["max_position_embeddings"]
    pos = np.arange(MP)
    causal = np.where(pos[None, :] <= pos[:, None], 0.0, -1e9).astype(np.float32)
    attention_mask = jnp.asarray(
        np.broadcast_to(causal, (B, NH, MP, MP)).copy())

    hidden_states, presents = deci_model_forward(
        params, input_ids, past_key_values, attention_mask, cfg)

    jax.block_until_ready(hidden_states)
    for p in presents:
        jax.block_until_ready(p)

    assert hidden_states.shape == (B, S, cfg["hidden_size"])
    assert all(p.shape == (B, 2, NKV, PAST + S, D) for p in presents)
    assert bool(jnp.all(jnp.isfinite(hidden_states)))
    print("KERNEL_OK")
</pallas_src>

<mosaic_0001>
module attributes {stable_mosaic.version = 11 : i64} {
  func.func @_norm_matmul_kernel(%arg0: i32, %arg1: i32, %arg2: memref<16x32xf32, #tpu.memory_space<vmem>>, %arg3: memref<1x32xf32, #tpu.memory_space<vmem>>, %arg4: memref<32x64xbf16, #tpu.memory_space<vmem>>, %arg5: memref<16x64xf32, #tpu.memory_space<vmem>>) attributes {dimension_semantics = [#tpu.dimension_semantics<parallel>, #tpu.dimension_semantics<parallel>], iteration_bounds = array<i64: 1, 1>, scalar_prefetch = 0 : i64, scratch_operands = 0 : i64, tpu.core_type = #tpu.core_type<tc>, window_params = [{transform_indices = @transform_0, window_bounds = array<i64: 16, 32>}, {pipeline_mode = #tpu.pipeline_mode<synchronous>, transform_indices = @transform_1, window_bounds = array<i64: 1, 32>}, {transform_indices = @transform_2, window_bounds = array<i64: 32, 64>}, {transform_indices = @transform_3, window_bounds = array<i64: 16, 64>}]} {
    %c0 = arith.constant 0 : index
    %c0_0 = arith.constant 0 : index
    %0 = vector.load %arg2[%c0, %c0_0] : memref<16x32xf32, #tpu.memory_space<vmem>>, vector<16x32xf32>
    %1 = arith.mulf %0, %0 : vector<16x32xf32>
    %cst = arith.constant dense<0.000000e+00> : vector<16xf32>
    %2 = vector.multi_reduction <add>, %1, %cst [1] : vector<16x32xf32> to vector<16xf32>
    %3 = vector.shape_cast %2 : vector<16xf32> to vector<16x1xf32>
    %cst_1 = arith.constant 3.200000e+01 : f32
    %4 = vector.broadcast %cst_1 : f32 to vector<16x1xf32>
    %5 = arith.divf %3, %4 : vector<16x1xf32>
    %cst_2 = arith.constant 9.99999997E-7 : f32
    %6 = vector.broadcast %cst_2 : f32 to vector<16x1xf32>
    %7 = arith.addf %5, %6 : vector<16x1xf32>
    %8 = math.rsqrt %7 : vector<16x1xf32>
    %9 = vector.broadcast %8 : vector<16x1xf32> to vector<16x32xf32>
    %10 = arith.mulf %0, %9 : vector<16x32xf32>
    %c0_3 = arith.constant 0 : index
    %c0_4 = arith.constant 0 : index
    %11 = vector.load %arg3[%c0_3, %c0_4] : memref<1x32xf32, #tpu.memory_space<vmem>>, vector<1x32xf32>
    %12 = vector.broadcast %11 : vector<1x32xf32> to vector<16x32xf32>
    %13 = arith.mulf %10, %12 : vector<16x32xf32>
    %14 = arith.truncf %13 : vector<16x32xf32> to vector<16x32xbf16>
    %c0_5 = arith.constant 0 : index
    %c0_6 = arith.constant 0 : index
    %15 = vector.load %arg4[%c0_5, %c0_6] : memref<32x64xbf16, #tpu.memory_space<vmem>>, vector<32x64xbf16>
    %cst_7 = arith.constant dense<0.000000e+00> : vector<16x64xf32>
    %16 = tpu.matmul %14, %15, %cst_7 {dimension_numbers = #tpu.dot_dimension_numbers<[1], [0], [0], [1], [0, 0, 1, 1], [], []>} : vector<16x32xbf16>, vector<32x64xbf16>, vector<16x64xf32> -> vector<16x64xf32>
    %c0_8 = arith.constant 0 : index
    %c0_9 = arith.constant 0 : index
    %17 = vector.load %arg5[%c0_8, %c0_9] : memref<16x64xf32, #tpu.memory_space<vmem>>, vector<16x64xf32>
    tpu.vector_store %arg5[%c0_8, %c0_9], %16 {strides = array<i32>} : memref<16x64xf32, #tpu.memory_space<vmem>>, vector<16x64xf32>,
    return
  }
  func.func @transform_0(%arg0: i32, %arg1: i32) -> (i32, i32) {
    %c0_i32 = arith.constant 0 : i32
    %c0_i32_0 = arith.constant 0 : i32
    return %arg0, %c0_i32 : i32, i32
  }
  func.func @transform_1(%arg0: i32, %arg1: i32) -> (i32, i32) {
    %c0_i32 = arith.constant 0 : i32
    %c0_i32_0 = arith.constant 0 : i32
    %c0_i32_1 = arith.constant 0 : i32
    return %c0_i32, %c0_i32_0 : i32, i32
  }
  func.func @transform_2(%arg0: i32, %arg1: i32) -> (i32, i32) {
    %c0_i32 = arith.constant 0 : i32
    %c0_i32_0 = arith.constant 0 : i32
    return %c0_i32, %arg1 : i32, i32
  }
  func.func @transform_3(%arg0: i32, %arg1: i32) -> (i32, i32) {
    %c0_i32 = arith.constant 0 : i32
    return %arg0, %arg1 : i32, i32
  }
}

</mosaic_0001>

<llo_original>
// kernel: tpu_custom_call.1
$region0: #{tpu_custom_call.1}
  #allocation0 [shape = 'u32[]', space=smem, size = 0x4, offset = 0x4, fixed_abs, tag = 'smem constant byte address 0x4 - core index']
  #allocation1 [shape = 'u32[72,128]{1,0:T(1,128)}', space=vmem, size = 0x9000, scoped, tag = 'internal scratch']
  %s0 = inlined_call_operand.hbm [shape: f32[16,32], index: 0, kind: input, shape index: {}]
  %s1 = inlined_call_operand.hbm [shape: f32[1,32], index: 1, kind: input, shape index: {}]
  %s2 = inlined_call_operand.hbm [shape: bf16[32,64], index: 2, kind: input, shape index: {}]
  %s3 = inlined_call_operand.hbm [shape: f32[16,64], index: 3, kind: output, shape index: {}]
  %s4 = sld [smem:[#allocation0]]
  $region34: #{tpu_custom_call.1} parent=0
    _
  %s6 = ssub.s32 1, %s4
  %s7 = scalar_select 0, %s6, %s4
  $region1: #{tpu_custom_call.1} parent=0
    #allocation2 [shape = 'u8[8192]{0}', space=vmem, size = 0x2000, scoped, tag = 'input window, operand 0, single buffered']
    #allocation3 [shape = 's32[1]{0}', space=sflag, size = 0x4, scoped, tag = 'scoped memory for tpu_custom_call.1']
    #allocation4 [shape = 's32[1]{0}', space=sflag, size = 0x4, scoped, tag = 'scoped memory for tpu_custom_call.1']
    #allocation5 [shape = 'u8[512]{0}', space=vmem, size = 0x400, scoped, tag = 'input window, operand 1, single buffered']
    #allocation6 [shape = 's32[1]{0}', space=sflag, size = 0x4, scoped, tag = 'scoped memory for tpu_custom_call.1']
    #allocation7 [shape = 'u8[8192]{0}', space=vmem, size = 0x2000, scoped, tag = 'input window, operand 2, single buffered']
    #allocation8 [shape = 'u8[8192]{0}', space=vmem, size = 0x2000, scoped, tag = 'output window, operand 0, single buffered']
    %8 = vsyncpa [#allocation3], 0
    %9 = vsyncpa [#allocation6], 0
    %10 = vsyncpa [#allocation4], 0
    // Predicated region
    $region2: #{tpu_custom_call.1} parent=1 // pred_check
      _
    $region3: #{tpu_custom_call.1} parent=1 // pred_check_branch
      %12 = sbr.rel (0) target = $region5
    $region4: #{tpu_custom_call.1} parent=1 // pred_region
      %14 = vsyncadd [#allocation3], 0
      %s15 = sshll.u32 %s0, 4
      %s16 = int_to_ptr.hbm [resolvable:$true] %s15
      %s17 = sshll.u32 [#allocation2], 4
      %s18 = int_to_ptr.vmem [resolvable:$true] %s17
      %23 = dma.hbm_to_vmem [thread:$0]  %s16, 256, %s18, [#allocation3], 128, 128, 8
    $region5: #{tpu_custom_call.1} parent=1 // pred_fallthru
      _
    // Predicated region
    $region6: #{tpu_custom_call.1} parent=1 // pred_check
      _
    $region7: #{tpu_custom_call.1} parent=1 // pred_check_branch
      %25 = sbr.rel (0) target = $region9
    $region8: #{tpu_custom_call.1} parent=1 // pred_region
      %27 = vsyncadd [#allocation6], 0
      %s29 = sshll.u32 %s1, 4
      %s30 = int_to_ptr.hbm [resolvable:$true] %s29
      %s31 = sshll.u32 [#allocation5], 4
      %s32 = int_to_ptr.vmem [resolvable:$true] %s31
      %34 = dma.hbm_to_vmem [thread:$0]  %s30, 16, %s32, [#allocation6]
    $region9: #{tpu_custom_call.1} parent=1 // pred_fallthru
      _
    // Predicated region
    $region10: #{tpu_custom_call.1} parent=1 // pred_check
      _
    $region11: #{tpu_custom_call.1} parent=1 // pred_check_branch
      %36 = sbr.rel (0) target = $region13
    $region12: #{tpu_custom_call.1} parent=1 // pred_region
      %38 = vsyncadd [#allocation6], 0
      %s39 = sshll.u32 %s2, 4
      %s40 = int_to_ptr.hbm [resolvable:$true] %s39
      %s41 = sshll.u32 [#allocation7], 4
      %s42 = int_to_ptr.vmem [resolvable:$true] %s41
      %47 = dma.hbm_to_vmem [thread:$0]  %s40, 256, %s42, [#allocation6], 64, 64, 4
    $region13: #{tpu_custom_call.1} parent=1 // pred_fallthru
      _
    // Predicated region
    $region14: #{tpu_custom_call.1} parent=1 // pred_check
      _
    $region15: #{tpu_custom_call.1} parent=1 // pred_check_branch
      %49 = sbr.rel (0) target = $region17
    $region16: #{tpu_custom_call.1} parent=1 // pred_region
      %51 = dma.done [#allocation3], 256
    $region17: #{tpu_custom_call.1} parent=1 // pred_fallthru
      _
    // Predicated region
    $region18: #{tpu_custom_call.1} parent=1 // pred_check
      _
    $region19: #{tpu_custom_call.1} parent=1 // pred_check_branch
      %53 = sbr.rel (0) target = $region21
    $region20: #{tpu_custom_call.1} parent=1 // pred_region
      %55 = dma.done [#allocation6], 16
    $region21: #{tpu_custom_call.1} parent=1 // pred_fallthru
      _
    // Predicated region
    $region22: #{tpu_custom_call.1} parent=1 // pred_check
      _
    $region23: #{tpu_custom_call.1} parent=1 // pred_check_branch
      %57 = sbr.rel (0) target = $region25
    $region24: #{tpu_custom_call.1} parent=1 // pred_region
      %59 = dma.done [#allocation6], 256
    $region25: #{tpu_custom_call.1} parent=1 // pred_fallthru
      _
    %v61 = vld [vmem:[#allocation2] sm:$0xff]
    %v62 = vld [vmem:[#allocation2 + $0x8] sm:$0xff]
    %v63 = vmul.f32 %v61, %v61
    %v64 = vmul.f32 %v62, %v62
    %vm65 = vcmask 261120
    %v66 = vsel %vm65, %v63, 0.0
    %67 = vadd.xlane.f32.xlu0 %v66
    %v68 = vpop.xlane.xlu0 %67
    %v69 = vsel %vm65, %v64, 0.0
    %70 = vadd.xlane.f32.xlu0 %v69
    %v71 = vpop.xlane.xlu0 %70
    %v72 = vrcp.pop 32.0
    %v73 = vmul.f32 32.0, %v72
    %v74 = vsub.f32 1.0, %v73
    %v75 = vmul.f32 %v72, %v74
    %v76 = vadd.f32 %v72, %v75
    %vm77 = vweird.f32 %v72
    %v78 = vsel %vm77, %v72, %v76
    %v79 = vmul.f32 %v68, %v78
    %v80 = vmul.f32 %v71, %v78
    %v81 = vadd.f32 %v79, 1e-06
    %v82 = vadd.f32 %v80, 1e-06
    %v83 = vrsqrt.pop %v81
    %v84 = vmul.f32 %v83, %v81
    %v85 = vmul.f32 %v84, %v83
    %v86 = vmul.f32 0.5, %v85
    %v87 = vsub.f32 1.5, %v86
    %v88 = vmul.f32 %v83, %v87
    %vm89 = vweird.f32 %v81
    %vm90 = vweird.f32 %v83
    %vm91 = vmor %vm89, %vm90
    %v92 = vsel %vm91, %v83, %v88
    %v93 = vrsqrt.pop %v82
    %v94 = vmul.f32 %v93, %v82
    %v95 = vmul.f32 %v94, %v93
    %v96 = vmul.f32 0.5, %v95
    %v97 = vsub.f32 1.5, %v96
    %v98 = vmul.f32 %v93, %v97
    %vm99 = vweird.f32 %v82
    %vm100 = vweird.f32 %v93
    %vm101 = vmor %vm99, %vm100
    %v102 = vsel %vm101, %v93, %v98
    %v103 = vmul.f32 %v61, %v92
    %v104 = vmul.f32 %v62, %v102
    %v105 = vld [vmem:[#allocation5] sm:$0x1]
    %v107 = vperm.slane %v105, 0
    %v109 = vmul.f32 %v103, %v107
    %v110 = vmul.f32 %v104, %v107
    %v111 = vpack.c.bf16 %v110, %v109
    %v112 = vld [vmem:[#allocation7] sm:$0xf]
    %v113 = vld [vmem:[#allocation7 + $0x4] sm:$0xf]
    %v114 = vld [vmem:[#allocation7 + $0x8] sm:$0xf]
    %v115 = vld [vmem:[#allocation7 + $0xc] sm:$0xf]
    %v120 = vunpack.c.l.b16 %v112
    %v121 = vunpack.c.l.b16 %v113
    %v122 = vunpack.c.l.b16 %v114
    %v123 = vunpack.c.l.b16 %v115
    %v124 = vpack.c.b16 %v121, %v120
    %v125 = vpack.c.b16 %v123, %v122
    %v129 = vsel %vm65, %v111, 0
    %131 = vmatpush.bf16.msra.mxu0 0
    %132 = vmatpush.bf16.msra.mxu0 0
    %133 = vmatpush.bf16.msra.mxu0 0
    %134 = vmatpush.bf16.msra.mxu0 0
    %135 = vmatpush.bf16.msra.mxu0 0
    %136 = vmatpush.bf16.msra.mxu0 0
    %137 = vmatpush.bf16.msra.mxu0 %v125
    %138 = vmatpush.bf16.msra.mxu0 %v124
    %139 = vmatmul.bf16.gmra.mxu0 %v129
    %v140 = vpop.f32.mrf.mxu0
    %v141 = vadd.f32 0.0, %v140
    %v142 = vpop.f32.mrf.mxu0
    %v143 = vadd.f32 0.0, %v142
    %144 = vdwg.mxu0
    %vm145 = vcmask 523264
    %146 = vst.msk [vmem:[#allocation8] sm:$0xff] %vm145, %v141
    %147 = vst.msk [vmem:[#allocation8 + $0x8] sm:$0xff] %vm145, %v143
    // Predicated region
    $region26: #{tpu_custom_call.1} parent=1 // pred_check
      _
    $region27: #{tpu_custom_call.1} parent=1 // pred_check_branch
      %149 = sbr.rel (0) target = $region29
    $region28: #{tpu_custom_call.1} parent=1 // pred_region
      %151 = vsyncadd [#allocation4], 0
      %s152 = sshll.u32 [#allocation8], 4
      %s153 = int_to_ptr.vmem [resolvable:$true] %s152
      %s154 = sshll.u32 %s3, 4
      %s155 = int_to_ptr.hbm [resolvable:$true] %s154
      %160 = dma.vmem_to_hbm [thread:$0]  %s153, 256, %s155, [#allocation4], 128, 128, 8
    $region29: #{tpu_custom_call.1} parent=1 // pred_fallthru
      _
    // Predicated region
    $region30: #{tpu_custom_call.1} parent=1 // pred_check
      _
    $region31: #{tpu_custom_call.1} parent=1 // pred_check_branch
      %162 = sbr.rel (0) target = $region33
    $region32: #{tpu_custom_call.1} parent=1 // pred_region
      %164 = dma.done [#allocation4], 256
    $region33: #{tpu_custom_call.1} parent=1 // pred_fallthru
      _
    %165 = vsyncpa [#allocation3], 1
    %166 = vsyncpa [#allocation6], 1
    %167 = vsyncpa [#allocation4], 1

</llo_original>
